<compile_context>
chip_gen: v5e
topology: v5e:2x2
jax: 0.10.0
libtpu: 0.0.40
codegen_flags: <defaults>
</compile_context>

<pallas_src>
from functools import partial

import jax
import jax.numpy as jnp
from jax.experimental import pallas as pl
from jax.experimental.pallas import tpu as pltpu

LANE_W = 512               # last dim: multiple of 128 -> full-width unmasked stores
MAX_TILE_R = 1024          # 1024 x 512 f32 = 2 MiB per tile buffer
SMALL_N_FAST_PATH = 4096   # below this, a fused jnp FMA beats kernel dispatch


def _linreg_kernel(w_ref, b_ref, x_ref, o_ref):
    # w_ref/b_ref are (1,) scalars in SMEM; x_ref/o_ref are lane-dense
    # (tile_r, LANE_W) f32 VMEM tiles. Pure VPU fused multiply-add.
    o_ref[...] = x_ref[...] * w_ref[0] + b_ref[0]


@partial(jax.jit, static_argnames=("force_pallas",))
def layer_linear_regression(x, weight, bias, force_pallas=False):
    """Pallas equivalent of nn.Linear(1, 1).forward.

    x: (N, 1) f32, weight: (1, 1) f32 (PyTorch [out, in] layout), bias: (1,) f32.
    Returns (N, 1) f32 = x @ W^T + b.
    """
    n = x.shape[0]
    # NOTE: reshape((1,)) hard-assumes nn.Linear(1, 1); fine for this module.
    w_flat = weight.reshape((1,)).astype(jnp.float32)
    b_flat = bias.reshape((1,)).astype(jnp.float32)
    x = x.astype(jnp.float32)

    # Small-N fast path: a single fused XLA elementwise op; kernel dispatch
    # overhead would dominate at the spec's 100-sample workload.
    if not force_pallas and n < SMALL_N_FAST_PATH:
        return x * w_flat[0] + b_flat[0]

    rows = -(-n // LANE_W)
    padded_len = rows * LANE_W

    x_flat = x.reshape((n,))
    if padded_len != n:
        # Only for N not a multiple of LANE_W: pad the tail (<= 511 elems).
        x_flat = jnp.pad(x_flat, (0, padded_len - n))
    x2d = x_flat.reshape((rows, LANE_W))   # free reshape when no pad was needed

    # Row tile: multiple of 8 (sublane), capped at 2 MiB, and guaranteeing
    # >= 2 grid blocks whenever rows > 8 so both v7x TensorCores get work.
    if rows <= 8:
        tile_r = rows                       # single block == full array dims
    else:
        tile_r = min(MAX_TILE_R, 8 * (-(-rows // 16)))
    grid = (pl.cdiv(rows, tile_r),)         # partial boundary block is masked

    out2d = pl.pallas_call(
        _linreg_kernel,
        out_shape=jax.ShapeDtypeStruct((rows, LANE_W), jnp.float32),
        grid=grid,
        in_specs=[
            pl.BlockSpec(memory_space=pltpu.MemorySpace.SMEM),   # weight (1,)
            pl.BlockSpec(memory_space=pltpu.MemorySpace.SMEM),   # bias (1,)
            pl.BlockSpec((tile_r, LANE_W), lambda i: (i, 0)),    # x row tile
        ],
        out_specs=pl.BlockSpec((tile_r, LANE_W), lambda i: (i, 0)),
        compiler_params=pltpu.CompilerParams(
            dimension_semantics=("parallel",),      # shard rows across v7x TCs
            vmem_limit_bytes=32 * 1024 * 1024,
        ),
    )(w_flat, b_flat, x2d)

    if padded_len == n:
        return out2d.reshape((n, 1))                # free reshape, no slice
    return out2d.reshape((padded_len,))[:n].reshape((n, 1))


if __name__ == "__main__":
    key = jax.random.PRNGKey(0)
    kx, kw, kb = jax.random.split(key, 3)

    # nn.Linear(1, 1) init: U(-1/sqrt(in_features), 1/sqrt(in_features)) = U(-1, 1).
    weight = jax.random.uniform(kw, (1, 1), dtype=jnp.float32, minval=-1.0, maxval=1.0)
    bias = jax.random.uniform(kb, (1,), dtype=jnp.float32, minval=-1.0, maxval=1.0)

    cases = [
        (100, True),    # spec batch (100,1), forced through the Pallas kernel (pad path, grid=(1,))
        (100, False),   # spec batch via the small-N fused-jnp fast path
        (8192, False),  # multiple of 512 -> zero-copy reshape, multi-block grid (auto Pallas)
        (6756, True),   # non-divisible, multi-block, exercises masked boundary row-block
    ]

    ok = True
    for n, force in cases:
        x = jax.random.uniform(kx, (n, 1), dtype=jnp.float32)
        out = layer_linear_regression(x, weight, bias, force_pallas=force)
        out = jax.block_until_ready(out)

        ref = x @ weight.T + bias  # reference: y = x @ W^T + b
        ok = ok and (out.shape == (n, 1)) and bool(
            jnp.allclose(out, ref, atol=1e-6, rtol=1e-6))

    assert ok, "mismatch vs reference"
    print("KERNEL_OK")
</pallas_src>

<mosaic_0001>
module attributes {stable_mosaic.version = 11 : i64} {
  func.func @_linreg_kernel(%arg0: i32, %arg1: memref<1xf32, #tpu.memory_space<smem>>, %arg2: memref<1xf32, #tpu.memory_space<smem>>, %arg3: memref<1x512xf32, #tpu.memory_space<vmem>>, %arg4: memref<1x512xf32, #tpu.memory_space<vmem>>) attributes {dimension_semantics = [#tpu.dimension_semantics<parallel>], iteration_bounds = array<i64: 1>, scalar_prefetch = 0 : i64, scratch_operands = 0 : i64, tpu.core_type = #tpu.core_type<tc>, window_params = [{transform_indices = @transform_0, window_bounds = array<i64: 1>}, {transform_indices = @transform_1, window_bounds = array<i64: 1>}, {transform_indices = @transform_2, window_bounds = array<i64: 1, 512>}, {transform_indices = @transform_3, window_bounds = array<i64: 1, 512>}]} {
    %c0 = arith.constant 0 : index
    %c0_0 = arith.constant 0 : index
    %0 = vector.load %arg3[%c0, %c0_0] : memref<1x512xf32, #tpu.memory_space<vmem>>, vector<1x512xf32>
    %c0_1 = arith.constant 0 : index
    %1 = memref.load %arg1[%c0_1] : memref<1xf32, #tpu.memory_space<smem>>
    %2 = vector.broadcast %1 : f32 to vector<1x512xf32>
    %3 = arith.mulf %0, %2 : vector<1x512xf32>
    %c0_2 = arith.constant 0 : index
    %4 = memref.load %arg2[%c0_2] : memref<1xf32, #tpu.memory_space<smem>>
    %5 = vector.broadcast %4 : f32 to vector<1x512xf32>
    %6 = arith.addf %3, %5 : vector<1x512xf32>
    %c0_3 = arith.constant 0 : index
    %c0_4 = arith.constant 0 : index
    %7 = vector.load %arg4[%c0_3, %c0_4] : memref<1x512xf32, #tpu.memory_space<vmem>>, vector<1x512xf32>
    tpu.vector_store %arg4[%c0_3, %c0_4], %6 {strides = array<i32>} : memref<1x512xf32, #tpu.memory_space<vmem>>, vector<1x512xf32>,
    return
  }
  func.func @transform_0(%arg0: i32) -> i32 {
    %c0_i32 = arith.constant 0 : i32
    %c0_i32_0 = arith.constant 0 : i32
    return %c0_i32 : i32
  }
  func.func @transform_1(%arg0: i32) -> i32 {
    %c0_i32 = arith.constant 0 : i32
    %c0_i32_0 = arith.constant 0 : i32
    return %c0_i32 : i32
  }
  func.func @transform_2(%arg0: i32) -> (i32, i32) {
    %c0_i32 = arith.constant 0 : i32
    %c0_i32_0 = arith.constant 0 : i32
    return %arg0, %c0_i32 : i32, i32
  }
  func.func @transform_3(%arg0: i32) -> (i32, i32) {
    %c0_i32 = arith.constant 0 : i32
    %c0_i32_0 = arith.constant 0 : i32
    return %arg0, %c0_i32 : i32, i32
  }
}

</mosaic_0001>

<llo_original>
// kernel: layer_linear_regression.1
$region0: #{layer_linear_regression.1}
  #allocation0 [shape = 'u32[]', space=smem, size = 0x4, offset = 0x4, fixed_abs, tag = 'smem constant byte address 0x4 - core index']
  #allocation1 [shape = 'u32[72,128]{1,0:T(1,128)}', space=vmem, size = 0x9000, scoped, tag = 'internal scratch']
  #allocation2 [shape = 'f32[1]{0:T(128)S(6)}', space=smem, size = 0x200, scoped, tag = 'scoped memory for layer_linear_regression.1']
  #allocation3 [shape = 'f32[1]{0:T(128)S(6)}', space=smem, size = 0x200, scoped, tag = 'scoped memory for layer_linear_regression.1']
  %s0 = inlined_call_operand.<no memory space> [shape: f32[1], index: 0, kind: input, shape index: {}]
  %s1 = inlined_call_operand.<no memory space> [shape: f32[1], index: 1, kind: input, shape index: {}]
  %s2 = inlined_call_operand.vmem [shape: f32[1,512], index: 2, kind: input, shape index: {}]
  %s3 = inlined_call_operand.vmem [shape: f32[1,512], index: 3, kind: output, shape index: {}]
  %s4 = sld [smem:[#allocation0]]
  $region22: #{layer_linear_regression.1} parent=0
    _
  %s6 = ssub.s32 1, %s4
  %s7 = scalar_select 0, %s6, %s4
  %8 = sst [smem:[#allocation2]] %s0
  %9 = sst [smem:[#allocation3]] %s1
  // Predicated region
  $region2: #{layer_linear_regression.1} parent=0 // pred_check
    _
  $region3: #{layer_linear_regression.1} parent=0 // pred_check_branch
    %11 = sbr.rel (0) target = $region5
  $region4: #{layer_linear_regression.1} parent=0 // pred_region
    _
  $region5: #{layer_linear_regression.1} parent=0 // pred_fallthru
    _
  // Predicated region
  $region6: #{layer_linear_regression.1} parent=0 // pred_check
    _
  $region7: #{layer_linear_regression.1} parent=0 // pred_check_branch
    %13 = sbr.rel (0) target = $region9
  $region8: #{layer_linear_regression.1} parent=0 // pred_region
    _
  $region9: #{layer_linear_regression.1} parent=0 // pred_fallthru
    _
  // Predicated region
  $region10: #{layer_linear_regression.1} parent=0 // pred_check
    _
  $region11: #{layer_linear_regression.1} parent=0 // pred_check_branch
    %15 = sbr.rel (0) target = $region13
  $region12: #{layer_linear_regression.1} parent=0 // pred_region
    _
  $region13: #{layer_linear_regression.1} parent=0 // pred_fallthru
    _
  %v16 = vld [vmem:[%s2] sm:$0xf]
  %s17 = sld [smem:[#allocation2]]
  %v18 = vstv %s17
  %v19 = vmul.f32 %v16, %v18
  %s20 = sld [smem:[#allocation3]]
  %v21 = vstv %s20
  %v22 = vadd.f32 %v19, %v21
  %v23 = vlaneseq
  %vm24 = vcmp.ge.s32.totalorder %v23, 0
  %vm25 = vcmp.lt.s32.totalorder %v23, 512
  %vm26 = vmand %vm24, %vm25
  %27 = vst.msk [vmem:[%s3] sm:$0xf] %vm26, %v22
  // Predicated region
  $region14: #{layer_linear_regression.1} parent=0 // pred_check
    _
  $region15: #{layer_linear_regression.1} parent=0 // pred_check_branch
    %29 = sbr.rel (0) target = $region17
  $region16: #{layer_linear_regression.1} parent=0 // pred_region
    _
  $region17: #{layer_linear_regression.1} parent=0 // pred_fallthru
    _
  // Predicated region
  $region18: #{layer_linear_regression.1} parent=0 // pred_check
    _
  $region19: #{layer_linear_regression.1} parent=0 // pred_check_branch
    %31 = sbr.rel (0) target = $region21
  $region20: #{layer_linear_regression.1} parent=0 // pred_region
    _
  $region21: #{layer_linear_regression.1} parent=0 // pred_fallthru
    _

</llo_original>
